<compile_context>
chip_gen: v6e
topology: v6e:2x2x1
jax: 0.10.0
libtpu: 0.0.40
codegen_flags: <defaults>
</compile_context>

<pallas_src>
import numpy as np
import jax
import jax.numpy as jnp
from jax import lax
from jax.experimental import pallas as pl
from jax.experimental.pallas import tpu as pltpu


NEG_SLOPE = 0.01  # torch.nn.LeakyReLU default negative_slope


def _round_up(x, m):
    return (x + m - 1) // m * m


# ----------------------------------------------------------------------------
# Fused ICM forward kernel — one batch tile per grid step.
# ----------------------------------------------------------------------------
def icm_kernel(
    state_ref, next_state_ref, act_ref,          # [TB,Dp], [TB,Dp], [TB,1] i32
    se_w1_ref, se_w2_ref,                        # [Dp,Hp], [Hp,Hp]
    w1a_cat_ref,                                 # [Hp, 2*Hp] = [inv_l1_state | fwd_l1_state]
    wi1b_ref,                                    # [Hp, Hp]  inverse l1 (next_state_ft part)
    wf1b_eff_ref,                                # [Ap, Hp]  emb @ forward l1 (action part)
    wi2_ref, wf2_ref,                            # [Hp, Ap], [Hp, Hp]
    bias_ref,                                    # [8, Cmax] packed biases
    action_hat_ref, next_state_hat_ref, next_state_ft_ref,
):
    f32 = jnp.float32
    Hp = se_w1_ref.shape[1]
    Ap = wf1b_eff_ref.shape[0]
    TB = state_ref.shape[0]

    def leaky(x):
        return jnp.where(x > 0, x, NEG_SLOPE * x)

    # Packed biases (one (8,128)-tile ref instead of six tiny inputs).
    b_se1 = bias_ref[0:1, :Hp]
    b_se2 = bias_ref[1:2, :Hp]
    b_i1 = bias_ref[2:3, :Hp]
    b_f1 = bias_ref[3:4, :Hp]
    b_i2 = bias_ref[4:5, :Ap]
    b_f2 = bias_ref[5:6, :Hp]

    # --- shared state encoder, both states stacked along M ------------------
    # One (2*TB,Dp)@(Dp,Hp) and one (2*TB,Hp)@(Hp,Hp) matmul: weights pushed
    # into the MXU once per layer, one result drain per layer.
    x2 = jnp.concatenate([state_ref[...], next_state_ref[...]], axis=0)
    h2 = leaky(jnp.dot(x2, se_w1_ref[...], preferred_element_type=f32) + b_se1)
    ft2 = jnp.dot(h2, se_w2_ref[...], preferred_element_type=f32) + b_se2
    s_ft = ft2[:TB]       # TB is 8-aligned -> clean sublane slices
    ns_ft = ft2[TB:]

    # --- action one-hot; the nn.Embedding table is already folded into ------
    # wf1b_eff (wrapper-side), so no separate embedding matmul is needed.
    iota = lax.broadcasted_iota(jnp.int32, (TB, Ap), 1)
    onehot = (iota == act_ref[...]).astype(f32)

    # --- fused layer-1 of inverse_model + forward_model ----------------------
    # Both consume state_ft: one N=2*Hp matmul, then free 128-aligned slices.
    h_cat = jnp.dot(s_ft, w1a_cat_ref[...], preferred_element_type=f32)
    h_inv = leaky(
        h_cat[:, :Hp]
        + jnp.dot(ns_ft, wi1b_ref[...], preferred_element_type=f32)
        + b_i1
    )
    h_fwd = leaky(
        h_cat[:, Hp:]
        + jnp.dot(onehot, wf1b_eff_ref[...], preferred_element_type=f32)
        + b_f1
    )

    action_hat = jnp.dot(h_inv, wi2_ref[...], preferred_element_type=f32) + b_i2
    next_state_hat = jnp.dot(h_fwd, wf2_ref[...], preferred_element_type=f32) + b_f2

    action_hat_ref[...] = action_hat.astype(action_hat_ref.dtype)
    next_state_hat_ref[...] = next_state_hat.astype(next_state_hat_ref.dtype)
    next_state_ft_ref[...] = ns_ft.astype(next_state_ft_ref.dtype)


# ----------------------------------------------------------------------------
# Batch tiling policy:
#  * split B evenly into ceil(B/batch_tile) tiles, each a multiple of 8 rows
#    (padding bounded to <8 rows per tile instead of up-to-TB rows);
#  * force >=2 (and an even number of) grid steps when the batch allows, so
#    v7x's 2 TensorCores both get work (no-op on v5e/v6e).
# ----------------------------------------------------------------------------
def _pick_tiles(B, batch_tile):
    B8 = _round_up(B, 8)
    n_tiles = pl.cdiv(B, batch_tile)
    if n_tiles == 1 and B8 >= 16:
        n_tiles = 2
    if n_tiles > 1 and n_tiles % 2 == 1:
        n_tiles += 1
    TB = _round_up(pl.cdiv(B8, n_tiles), 8)
    return n_tiles, TB


# ----------------------------------------------------------------------------
# Wrapper: pads to TPU-friendly shapes, folds the embedding table into the
# forward-model layer-1 weight, builds the grid/BlockSpecs, slices the logical
# results back out.
# ----------------------------------------------------------------------------
def icm_forward(state, next_state, action, params, *, batch_tile=1024):
    """Returns (action_hat [B,n_actions], next_state_hat [B,H], next_state_ft [B,H])."""
    f32 = jnp.float32
    hi = lax.Precision.HIGHEST
    B, input_size = state.shape
    hidden = params["se_w1"].shape[1]
    n_actions = params["emb"].shape[0]

    Dp = _round_up(input_size, 128)
    Hp = _round_up(hidden, 128)
    Ap = _round_up(n_actions, 128)
    Cmax = max(Hp, Ap)

    n_tiles, TB = _pick_tiles(B, batch_tile)
    Bp = n_tiles * TB

    def pad2(x, r, c):
        return jnp.pad(x.astype(f32), ((0, r - x.shape[0]), (0, c - x.shape[1])))

    state_p = pad2(state, Bp, Dp)
    next_state_p = pad2(next_state, Bp, Dp)
    act_p = jnp.pad(action.reshape(B).astype(jnp.int32), (0, Bp - B)).reshape(Bp, 1)

    emb_p = pad2(params["emb"], Ap, Ap)
    se_w1_p = pad2(params["se_w1"], Dp, Hp)
    se_w2_p = pad2(params["se_w2"], Hp, Hp)

    wi1 = params["wi1"]                       # [2*hidden, hidden]
    wf1 = params["wf1"]                       # [hidden + n_actions, hidden]
    wi1a_p = pad2(wi1[:hidden], Hp, Hp)
    wi1b_p = pad2(wi1[hidden:], Hp, Hp)
    wf1a_p = pad2(wf1[:hidden], Hp, Hp)
    wf1b_p = pad2(wf1[hidden:], Ap, Hp)
    w1a_cat = jnp.concatenate([wi1a_p, wf1a_p], axis=1)   # [Hp, 2*Hp]

    # Fold the embedding table into the forward-model layer-1 action weight:
    # act_enc @ wf1b == onehot @ (emb @ wf1b). Done once, outside the kernel.
    wf1b_eff = jnp.dot(emb_p, wf1b_p, precision=hi)        # [Ap, Hp]

    wi2_p = pad2(params["wi2"], Hp, Ap)
    wf2_p = pad2(params["wf2"], Hp, Hp)

    def pad_b(b):
        b = b.astype(f32)
        return jnp.pad(b, (0, Cmax - b.shape[0]))

    bias_pack = jnp.zeros((8, Cmax), f32)
    bias_pack = bias_pack.at[0, :].set(pad_b(params["se_b1"]))
    bias_pack = bias_pack.at[1, :].set(pad_b(params["se_b2"]))
    bias_pack = bias_pack.at[2, :].set(pad_b(params["bi1"]))
    bias_pack = bias_pack.at[3, :].set(pad_b(params["bf1"]))
    bias_pack = bias_pack.at[4, :].set(pad_b(params["bi2"]))
    bias_pack = bias_pack.at[5, :].set(pad_b(params["bf2"]))

    grid = (n_tiles,)

    def tiled(feat):
        return pl.BlockSpec((TB, feat), lambda i: (i, 0))

    def resident(arr):
        # Constant index_map -> weights stay VMEM-resident across all tiles.
        return pl.BlockSpec(arr.shape, lambda i: (0, 0))

    flat_inputs = [
        state_p, next_state_p, act_p,
        se_w1_p, se_w2_p,
        w1a_cat, wi1b_p, wf1b_eff, wi2_p, wf2_p,
        bias_pack,
    ]
    in_specs = [
        tiled(Dp), tiled(Dp), tiled(1),
        resident(se_w1_p), resident(se_w2_p),
        resident(w1a_cat), resident(wi1b_p), resident(wf1b_eff),
        resident(wi2_p), resident(wf2_p),
        resident(bias_pack),
    ]

    action_hat_p, next_state_hat_p, next_state_ft_p = pl.pallas_call(
        icm_kernel,
        out_shape=(
            jax.ShapeDtypeStruct((Bp, Ap), f32),
            jax.ShapeDtypeStruct((Bp, Hp), f32),
            jax.ShapeDtypeStruct((Bp, Hp), f32),
        ),
        grid=grid,
        in_specs=in_specs,
        out_specs=(tiled(Ap), tiled(Hp), tiled(Hp)),
        compiler_params=pltpu.CompilerParams(
            dimension_semantics=("parallel",),
        ),
    )(*flat_inputs)

    return (
        action_hat_p[:B, :n_actions],
        next_state_hat_p[:B, :hidden],
        next_state_ft_p[:B, :hidden],
    )


# ----------------------------------------------------------------------------
# Parameter init matching the torch module: orthogonal(sqrt(2)) Linear weights,
# zero biases; nn.Embedding keeps its default N(0,1) init.
# Weights stored as [in_features, out_features].
# ----------------------------------------------------------------------------
def make_params(key, input_size, hidden_size, n_actions):
    ortho = jax.nn.initializers.orthogonal(scale=float(np.sqrt(2.0)))
    ks = jax.random.split(key, 7)
    return {
        "emb": jax.random.normal(ks[0], (n_actions, n_actions), jnp.float32),
        # state_encoder: Linear(in,H) -> LeakyReLU -> Linear(H,H)
        "se_w1": ortho(ks[1], (input_size, hidden_size), jnp.float32),
        "se_b1": jnp.zeros((hidden_size,), jnp.float32),
        "se_w2": ortho(ks[2], (hidden_size, hidden_size), jnp.float32),
        "se_b2": jnp.zeros((hidden_size,), jnp.float32),
        # inverse_model: Linear(2H,H) -> LeakyReLU -> Linear(H,n_actions)
        "wi1": ortho(ks[3], (2 * hidden_size, hidden_size), jnp.float32),
        "bi1": jnp.zeros((hidden_size,), jnp.float32),
        "wi2": ortho(ks[4], (hidden_size, n_actions), jnp.float32),
        "bi2": jnp.zeros((n_actions,), jnp.float32),
        # forward_model: Linear(H+n_actions,H) -> LeakyReLU -> Linear(H,H)
        "wf1": ortho(ks[5], (hidden_size + n_actions, hidden_size), jnp.float32),
        "bf1": jnp.zeros((hidden_size,), jnp.float32),
        "wf2": ortho(ks[6], (hidden_size, hidden_size), jnp.float32),
        "bf2": jnp.zeros((hidden_size,), jnp.float32),
    }


# Pure-JAX reference (mirrors the torch forward()) for the correctness check.
def ref_forward(state, next_state, action, p):
    hp = lax.Precision.HIGHEST

    def leaky(x):
        return jnp.where(x > 0, x, NEG_SLOPE * x)

    act_enc = p["emb"][action]

    def enc(x):
        h = leaky(jnp.dot(x, p["se_w1"], precision=hp) + p["se_b1"])
        return jnp.dot(h, p["se_w2"], precision=hp) + p["se_b2"]

    s_ft, ns_ft = enc(state), enc(next_state)
    h = leaky(jnp.dot(jnp.concatenate([s_ft, ns_ft], 1), p["wi1"], precision=hp) + p["bi1"])
    action_hat = jnp.dot(h, p["wi2"], precision=hp) + p["bi2"]
    h = leaky(jnp.dot(jnp.concatenate([s_ft, act_enc], 1), p["wf1"], precision=hp) + p["bf1"])
    next_state_hat = jnp.dot(h, p["wf2"], precision=hp) + p["bf2"]
    return action_hat, next_state_hat, ns_ft


if __name__ == "__main__":
    batch = 8
    input_size = 16
    hidden_size = 32
    n_actions = 4

    key = jax.random.PRNGKey(0)
    ks, kn, ka, kp = jax.random.split(key, 4)
    state = jax.random.normal(ks, (batch, input_size), jnp.float32)
    next_state = jax.random.normal(kn, (batch, input_size), jnp.float32)
    action = jax.random.randint(ka, (batch,), 0, n_actions, jnp.int32)
    params = make_params(kp, input_size, hidden_size, n_actions)

    outs = icm_forward(state, next_state, action, params)
    jax.block_until_ready(outs)
    action_hat, next_state_hat, next_state_ft = outs

    ref = ref_forward(state, next_state, action, params)
    for got, want in zip(outs, ref):
        np.testing.assert_allclose(
            np.asarray(got), np.asarray(want), rtol=1e-4, atol=1e-4
        )

    assert action_hat.shape == (batch, n_actions)
    assert next_state_hat.shape == (batch, hidden_size)
    assert next_state_ft.shape == (batch, hidden_size)

    print("KERNEL_OK")
</pallas_src>

<mosaic_0001>
module attributes {stable_mosaic.version = 11 : i64} {
  func.func @icm_kernel(%arg0: i32, %arg1: memref<8x128xf32, #tpu.memory_space<vmem>>, %arg2: memref<8x128xf32, #tpu.memory_space<vmem>>, %arg3: memref<8x1xi32, #tpu.memory_space<vmem>>, %arg4: memref<128x128xf32, #tpu.memory_space<vmem>>, %arg5: memref<128x128xf32, #tpu.memory_space<vmem>>, %arg6: memref<128x256xf32, #tpu.memory_space<vmem>>, %arg7: memref<128x128xf32, #tpu.memory_space<vmem>>, %arg8: memref<128x128xf32, #tpu.memory_space<vmem>>, %arg9: memref<128x128xf32, #tpu.memory_space<vmem>>, %arg10: memref<128x128xf32, #tpu.memory_space<vmem>>, %arg11: memref<8x128xf32, #tpu.memory_space<vmem>>, %arg12: memref<8x128xf32, #tpu.memory_space<vmem>>, %arg13: memref<8x128xf32, #tpu.memory_space<vmem>>, %arg14: memref<8x128xf32, #tpu.memory_space<vmem>>) attributes {dimension_semantics = [#tpu.dimension_semantics<parallel>], iteration_bounds = array<i64: 1>, scalar_prefetch = 0 : i64, scratch_operands = 0 : i64, tpu.core_type = #tpu.core_type<tc>, window_params = [{transform_indices = @transform_0, window_bounds = array<i64: 8, 128>}, {transform_indices = @transform_1, window_bounds = array<i64: 8, 128>}, {transform_indices = @transform_2, window_bounds = array<i64: 8, 1>}, {pipeline_mode = #tpu.pipeline_mode<synchronous>, transform_indices = @transform_3, window_bounds = array<i64: 128, 128>}, {pipeline_mode = #tpu.pipeline_mode<synchronous>, transform_indices = @transform_4, window_bounds = array<i64: 128, 128>}, {pipeline_mode = #tpu.pipeline_mode<synchronous>, transform_indices = @transform_5, window_bounds = array<i64: 128, 256>}, {pipeline_mode = #tpu.pipeline_mode<synchronous>, transform_indices = @transform_6, window_bounds = array<i64: 128, 128>}, {pipeline_mode = #tpu.pipeline_mode<synchronous>, transform_indices = @transform_7, window_bounds = array<i64: 128, 128>}, {pipeline_mode = #tpu.pipeline_mode<synchronous>, transform_indices = @transform_8, window_bounds = array<i64: 128, 128>}, {pipeline_mode = #tpu.pipeline_mode<synchronous>, transform_indices = @transform_9, window_bounds = array<i64: 128, 128>}, {pipeline_mode = #tpu.pipeline_mode<synchronous>, transform_indices = @transform_10, window_bounds = array<i64: 8, 128>}, {transform_indices = @transform_11, window_bounds = array<i64: 8, 128>}, {transform_indices = @transform_12, window_bounds = array<i64: 8, 128>}, {transform_indices = @transform_13, window_bounds = array<i64: 8, 128>}]} {
    %c0 = arith.constant 0 : index
    %c0_0 = arith.constant 0 : index
    %0 = vector.load %arg11[%c0, %c0_0] : memref<8x128xf32, #tpu.memory_space<vmem>>, vector<1x128xf32>
    %c1 = arith.constant 1 : index
    %c0_1 = arith.constant 0 : index
    %1 = vector.load %arg11[%c1, %c0_1] : memref<8x128xf32, #tpu.memory_space<vmem>>, vector<1x128xf32>
    %c2 = arith.constant 2 : index
    %c0_2 = arith.constant 0 : index
    %2 = vector.load %arg11[%c2, %c0_2] : memref<8x128xf32, #tpu.memory_space<vmem>>, vector<1x128xf32>
    %c3 = arith.constant 3 : index
    %c0_3 = arith.constant 0 : index
    %3 = vector.load %arg11[%c3, %c0_3] : memref<8x128xf32, #tpu.memory_space<vmem>>, vector<1x128xf32>
    %c4 = arith.constant 4 : index
    %c0_4 = arith.constant 0 : index
    %4 = vector.load %arg11[%c4, %c0_4] : memref<8x128xf32, #tpu.memory_space<vmem>>, vector<1x128xf32>
    %c5 = arith.constant 5 : index
    %c0_5 = arith.constant 0 : index
    %5 = vector.load %arg11[%c5, %c0_5] : memref<8x128xf32, #tpu.memory_space<vmem>>, vector<1x128xf32>
    %c0_6 = arith.constant 0 : index
    %c0_7 = arith.constant 0 : index
    %6 = vector.load %arg1[%c0_6, %c0_7] : memref<8x128xf32, #tpu.memory_space<vmem>>, vector<8x128xf32>
    %c0_8 = arith.constant 0 : index
    %c0_9 = arith.constant 0 : index
    %7 = vector.load %arg2[%c0_8, %c0_9] : memref<8x128xf32, #tpu.memory_space<vmem>>, vector<8x128xf32>
    %8 = tpu.concatenate %6, %7 in 0 : vector<8x128xf32>, vector<8x128xf32> -> vector<16x128xf32>
    %c0_10 = arith.constant 0 : index
    %c0_11 = arith.constant 0 : index
    %9 = vector.load %arg4[%c0_10, %c0_11] : memref<128x128xf32, #tpu.memory_space<vmem>>, vector<128x128xf32>
    %cst = arith.constant dense<0.000000e+00> : vector<16x128xf32>
    %10 = tpu.matmul %8, %9, %cst {dimension_numbers = #tpu.dot_dimension_numbers<[1], [0], [0], [1], [0, 0, 1, 1], [], []>} : vector<16x128xf32>, vector<128x128xf32>, vector<16x128xf32> -> vector<16x128xf32>
    %11 = vector.broadcast %0 : vector<1x128xf32> to vector<16x128xf32>
    %12 = arith.addf %10, %11 : vector<16x128xf32>
    %cst_12 = arith.constant 0.000000e+00 : f32
    %13 = vector.broadcast %cst_12 : f32 to vector<16x128xf32>
    %14 = arith.cmpf ogt, %12, %13 : vector<16x128xf32>
    %cst_13 = arith.constant 0.00999999977 : f32
    %15 = vector.broadcast %cst_13 : f32 to vector<16x128xf32>
    %16 = arith.mulf %15, %12 : vector<16x128xf32>
    %17 = arith.select %14, %12, %16 : vector<16x128xi1>, vector<16x128xf32>
    %c0_14 = arith.constant 0 : index
    %c0_15 = arith.constant 0 : index
    %18 = vector.load %arg5[%c0_14, %c0_15] : memref<128x128xf32, #tpu.memory_space<vmem>>, vector<128x128xf32>
    %cst_16 = arith.constant dense<0.000000e+00> : vector<16x128xf32>
    %19 = tpu.matmul %17, %18, %cst_16 {dimension_numbers = #tpu.dot_dimension_numbers<[1], [0], [0], [1], [0, 0, 1, 1], [], []>} : vector<16x128xf32>, vector<128x128xf32>, vector<16x128xf32> -> vector<16x128xf32>
    %20 = vector.broadcast %1 : vector<1x128xf32> to vector<16x128xf32>
    %21 = arith.addf %19, %20 : vector<16x128xf32>
    %22 = vector.extract_strided_slice %21 {offsets = [0, 0], sizes = [8, 128], strides = [1, 1]} : vector<16x128xf32> to vector<8x128xf32>
    %23 = vector.extract_strided_slice %21 {offsets = [8, 0], sizes = [8, 128], strides = [1, 1]} : vector<16x128xf32> to vector<8x128xf32>
    %24 = tpu.iota {dimensions = array<i32: 1>} : vector<8x128xi32>
    %c0_17 = arith.constant 0 : index
    %c0_18 = arith.constant 0 : index
    %25 = vector.load %arg3[%c0_17, %c0_18] : memref<8x1xi32, #tpu.memory_space<vmem>>, vector<8x1xi32>
    %26 = vector.broadcast %25 : vector<8x1xi32> to vector<8x128xi32>
    %27 = arith.cmpi eq, %24, %26 : vector<8x128xi32>
    %28 = arith.extui %27 : vector<8x128xi1> to vector<8x128xi32>
    %29 = arith.sitofp %28 : vector<8x128xi32> to vector<8x128xf32>
    %c0_19 = arith.constant 0 : index
    %c0_20 = arith.constant 0 : index
    %30 = vector.load %arg6[%c0_19, %c0_20] : memref<128x256xf32, #tpu.memory_space<vmem>>, vector<128x256xf32>
    %cst_21 = arith.constant dense<0.000000e+00> : vector<8x256xf32>
    %31 = tpu.matmul %22, %30, %cst_21 {dimension_numbers = #tpu.dot_dimension_numbers<[1], [0], [0], [1], [0, 0, 1, 1], [], []>} : vector<8x128xf32>, vector<128x256xf32>, vector<8x256xf32> -> vector<8x256xf32>
    %32 = vector.extract_strided_slice %31 {offsets = [0, 0], sizes = [8, 128], strides = [1, 1]} : vector<8x256xf32> to vector<8x128xf32>
    %c0_22 = arith.constant 0 : index
    %c0_23 = arith.constant 0 : index
    %33 = vector.load %arg7[%c0_22, %c0_23] : memref<128x128xf32, #tpu.memory_space<vmem>>, vector<128x128xf32>
    %cst_24 = arith.constant dense<0.000000e+00> : vector<8x128xf32>
    %34 = tpu.matmul %23, %33, %cst_24 {dimension_numbers = #tpu.dot_dimension_numbers<[1], [0], [0], [1], [0, 0, 1, 1], [], []>} : vector<8x128xf32>, vector<128x128xf32>, vector<8x128xf32> -> vector<8x128xf32>
    %35 = arith.addf %32, %34 : vector<8x128xf32>
    %36 = vector.broadcast %2 : vector<1x128xf32> to vector<8x128xf32>
    %37 = arith.addf %35, %36 : vector<8x128xf32>
    %cst_25 = arith.constant 0.000000e+00 : f32
    %38 = vector.broadcast %cst_25 : f32 to vector<8x128xf32>
    %39 = arith.cmpf ogt, %37, %38 : vector<8x128xf32>
    %cst_26 = arith.constant 0.00999999977 : f32
    %40 = vector.broadcast %cst_26 : f32 to vector<8x128xf32>
    %41 = arith.mulf %40, %37 : vector<8x128xf32>
    %42 = arith.select %39, %37, %41 : vector<8x128xi1>, vector<8x128xf32>
    %43 = vector.extract_strided_slice %31 {offsets = [0, 128], sizes = [8, 128], strides = [1, 1]} : vector<8x256xf32> to vector<8x128xf32>
    %c0_27 = arith.constant 0 : index
    %c0_28 = arith.constant 0 : index
    %44 = vector.load %arg8[%c0_27, %c0_28] : memref<128x128xf32, #tpu.memory_space<vmem>>, vector<128x128xf32>
    %cst_29 = arith.constant dense<0.000000e+00> : vector<8x128xf32>
    %45 = tpu.matmul %29, %44, %cst_29 {dimension_numbers = #tpu.dot_dimension_numbers<[1], [0], [0], [1], [0, 0, 1, 1], [], []>} : vector<8x128xf32>, vector<128x128xf32>, vector<8x128xf32> -> vector<8x128xf32>
    %46 = arith.addf %43, %45 : vector<8x128xf32>
    %47 = vector.broadcast %3 : vector<1x128xf32> to vector<8x128xf32>
    %48 = arith.addf %46, %47 : vector<8x128xf32>
    %cst_30 = arith.constant 0.000000e+00 : f32
    %49 = vector.broadcast %cst_30 : f32 to vector<8x128xf32>
    %50 = arith.cmpf ogt, %48, %49 : vector<8x128xf32>
    %cst_31 = arith.constant 0.00999999977 : f32
    %51 = vector.broadcast %cst_31 : f32 to vector<8x128xf32>
    %52 = arith.mulf %51, %48 : vector<8x128xf32>
    %53 = arith.select %50, %48, %52 : vector<8x128xi1>, vector<8x128xf32>
    %c0_32 = arith.constant 0 : index
    %c0_33 = arith.constant 0 : index
    %54 = vector.load %arg9[%c0_32, %c0_33] : memref<128x128xf32, #tpu.memory_space<vmem>>, vector<128x128xf32>
    %cst_34 = arith.constant dense<0.000000e+00> : vector<8x128xf32>
    %55 = tpu.matmul %42, %54, %cst_34 {dimension_numbers = #tpu.dot_dimension_numbers<[1], [0], [0], [1], [0, 0, 1, 1], [], []>} : vector<8x128xf32>, vector<128x128xf32>, vector<8x128xf32> -> vector<8x128xf32>
    %56 = vector.broadcast %4 : vector<1x128xf32> to vector<8x128xf32>
    %57 = arith.addf %55, %56 : vector<8x128xf32>
    %c0_35 = arith.constant 0 : index
    %c0_36 = arith.constant 0 : index
    %58 = vector.load %arg10[%c0_35, %c0_36] : memref<128x128xf32, #tpu.memory_space<vmem>>, vector<128x128xf32>
    %cst_37 = arith.constant dense<0.000000e+00> : vector<8x128xf32>
    %59 = tpu.matmul %53, %58, %cst_37 {dimension_numbers = #tpu.dot_dimension_numbers<[1], [0], [0], [1], [0, 0, 1, 1], [], []>} : vector<8x128xf32>, vector<128x128xf32>, vector<8x128xf32> -> vector<8x128xf32>
    %60 = vector.broadcast %5 : vector<1x128xf32> to vector<8x128xf32>
    %61 = arith.addf %59, %60 : vector<8x128xf32>
    %c0_38 = arith.constant 0 : index
    %c0_39 = arith.constant 0 : index
    %62 = vector.load %arg12[%c0_38, %c0_39] : memref<8x128xf32, #tpu.memory_space<vmem>>, vector<8x128xf32>
    tpu.vector_store %arg12[%c0_38, %c0_39], %57 {strides = array<i32>} : memref<8x128xf32, #tpu.memory_space<vmem>>, vector<8x128xf32>,
    %c0_40 = arith.constant 0 : index
    %c0_41 = arith.constant 0 : index
    %63 = vector.load %arg13[%c0_40, %c0_41] : memref<8x128xf32, #tpu.memory_space<vmem>>, vector<8x128xf32>
    tpu.vector_store %arg13[%c0_40, %c0_41], %61 {strides = array<i32>} : memref<8x128xf32, #tpu.memory_space<vmem>>, vector<8x128xf32>,
    %c0_42 = arith.constant 0 : index
    %c0_43 = arith.constant 0 : index
    %64 = vector.load %arg14[%c0_42, %c0_43] : memref<8x128xf32, #tpu.memory_space<vmem>>, vector<8x128xf32>
    tpu.vector_store %arg14[%c0_42, %c0_43], %23 {strides = array<i32>} : memref<8x128xf32, #tpu.memory_space<vmem>>, vector<8x128xf32>,
    return
  }
  func.func @transform_0(%arg0: i32) -> (i32, i32) {
    %c0_i32 = arith.constant 0 : i32
    %c0_i32_0 = arith.constant 0 : i32
    return %arg0, %c0_i32 : i32, i32
  }
  func.func @transform_1(%arg0: i32) -> (i32, i32) {
    %c0_i32 = arith.constant 0 : i32
    %c0_i32_0 = arith.constant 0 : i32
    return %arg0, %c0_i32 : i32, i32
  }
  func.func @transform_2(%arg0: i32) -> (i32, i32) {
    %c0_i32 = arith.constant 0 : i32
    %c0_i32_0 = arith.constant 0 : i32
    return %arg0, %c0_i32 : i32, i32
  }
  func.func @transform_3(%arg0: i32) -> (i32, i32) {
    %c0_i32 = arith.constant 0 : i32
    %c0_i32_0 = arith.constant 0 : i32
    %c0_i32_1 = arith.constant 0 : i32
    return %c0_i32, %c0_i32_0 : i32, i32
  }
  func.func @transform_4(%arg0: i32) -> (i32, i32) {
    %c0_i32 = arith.constant 0 : i32
    %c0_i32_0 = arith.constant 0 : i32
    %c0_i32_1 = arith.constant 0 : i32
    return %c0_i32, %c0_i32_0 : i32, i32
  }
  func.func @transform_5(%arg0: i32) -> (i32, i32) {
    %c0_i32 = arith.constant 0 : i32
    %c0_i32_0 = arith.constant 0 : i32
    %c0_i32_1 = arith.constant 0 : i32
    return %c0_i32, %c0_i32_0 : i32, i32
  }
  func.func @transform_6(%arg0: i32) -> (i32, i32) {
    %c0_i32 = arith.constant 0 : i32
    %c0_i32_0 = arith.constant 0 : i32
    %c0_i32_1 = arith.constant 0 : i32
    return %c0_i32, %c0_i32_0 : i32, i32
  }
  func.func @transform_7(%arg0: i32) -> (i32, i32) {
    %c0_i32 = arith.constant 0 : i32
    %c0_i32_0 = arith.constant 0 : i32
    %c0_i32_1 = arith.constant 0 : i32
    return %c0_i32, %c0_i32_0 : i32, i32
  }
  func.func @transform_8(%arg0: i32) -> (i32, i32) {
    %c0_i32 = arith.constant 0 : i32
    %c0_i32_0 = arith.constant 0 : i32
    %c0_i32_1 = arith.constant 0 : i32
    return %c0_i32, %c0_i32_0 : i32, i32
  }
  func.func @transform_9(%arg0: i32) -> (i32, i32) {
    %c0_i32 = arith.constant 0 : i32
    %c0_i32_0 = arith.constant 0 : i32
    %c0_i32_1 = arith.constant 0 : i32
    return %c0_i32, %c0_i32_0 : i32, i32
  }
  func.func @transform_10(%arg0: i32) -> (i32, i32) {
    %c0_i32 = arith.constant 0 : i32
    %c0_i32_0 = arith.constant 0 : i32
    %c0_i32_1 = arith.constant 0 : i32
    return %c0_i32, %c0_i32_0 : i32, i32
  }
  func.func @transform_11(%arg0: i32) -> (i32, i32) {
    %c0_i32 = arith.constant 0 : i32
    %c0_i32_0 = arith.constant 0 : i32
    return %arg0, %c0_i32 : i32, i32
  }
  func.func @transform_12(%arg0: i32) -> (i32, i32) {
    %c0_i32 = arith.constant 0 : i32
    %c0_i32_0 = arith.constant 0 : i32
    return %arg0, %c0_i32 : i32, i32
  }
  func.func @transform_13(%arg0: i32) -> (i32, i32) {
    %c0_i32 = arith.constant 0 : i32
    %c0_i32_0 = arith.constant 0 : i32
    return %arg0, %c0_i32 : i32, i32
  }
}

</mosaic_0001>

<llo_original>
// kernel: tpu_custom_call.1
$region0: #{tpu_custom_call.1}
  #allocation0 [shape = 'u32[]', space=smem, size = 0x4, offset = 0x4, fixed_abs, tag = 'smem constant byte address 0x4 - core index']
  #allocation1 [shape = 'u32[144,128]{1,0:T(1,128)}', space=vmem, size = 0x12000, scoped, tag = 'internal scratch']
  %s0 = inlined_call_operand.vmem [shape: f32[8,128], index: 0, kind: input, shape index: {}]
  %s1 = inlined_call_operand.hbm [shape: f32[8,128], index: 1, kind: input, shape index: {}]
  %s2 = inlined_call_operand.vmem [shape: s32[8,1], index: 2, kind: input, shape index: {}]
  %s3 = inlined_call_operand.hbm [shape: f32[128,128], index: 3, kind: input, shape index: {}]
  %s4 = inlined_call_operand.hbm [shape: f32[128,128], index: 4, kind: input, shape index: {}]
  %s5 = inlined_call_operand.hbm [shape: f32[128,256], index: 5, kind: input, shape index: {}]
  %s6 = inlined_call_operand.hbm [shape: f32[128,128], index: 6, kind: input, shape index: {}]
  %s7 = inlined_call_operand.hbm [shape: f32[128,128], index: 7, kind: input, shape index: {}]
  %s8 = inlined_call_operand.hbm [shape: f32[128,128], index: 8, kind: input, shape index: {}]
  %s9 = inlined_call_operand.hbm [shape: f32[128,128], index: 9, kind: input, shape index: {}]
  %s10 = inlined_call_operand.vmem [shape: f32[8,128], index: 10, kind: input, shape index: {}]
  %s11 = inlined_call_operand.hbm [shape: f32[8,128], index: 11, kind: output, shape index: {0}]
  %s12 = inlined_call_operand.hbm [shape: f32[8,128], index: 12, kind: output, shape index: {1}]
  %s13 = inlined_call_operand.hbm [shape: f32[8,128], index: 13, kind: output, shape index: {2}]
  %14 = xla_tuple %s11, %s12, %s13
  %s15 = sld [smem:[#allocation0]]
  $region102: #{tpu_custom_call.1} parent=0
    _
  %s17 = ssub.s32 1, %s15
  %s18 = scalar_select 0, %s17, %s15
  $region1: #{tpu_custom_call.1} parent=0
    #allocation2 [shape = 'u8[4096]{0}', space=vmem, size = 0x1000, scoped, tag = 'input window, operand 1, single buffered']
    #allocation3 [shape = 's32[1]{0}', space=sflag, size = 0x4, scoped, tag = 'scoped memory for tpu_custom_call.1']
    #allocation4 [shape = 's32[1]{0}', space=sflag, size = 0x4, scoped, tag = 'scoped memory for tpu_custom_call.1']
    #allocation5 [shape = 'u8[65536]{0}', space=vmem, size = 0x10000, scoped, tag = 'input window, operand 3, single buffered']
    #allocation6 [shape = 's32[1]{0}', space=sflag, size = 0x4, scoped, tag = 'scoped memory for tpu_custom_call.1']
    #allocation7 [shape = 'u8[65536]{0}', space=vmem, size = 0x10000, scoped, tag = 'input window, operand 4, single buffered']
    #allocation8 [shape = 'u8[131072]{0}', space=vmem, size = 0x20000, scoped, tag = 'input window, operand 5, single buffered']
    #allocation9 [shape = 's32[1]{0}', space=sflag, size = 0x4, scoped, tag = 'scoped memory for tpu_custom_call.1']
    #allocation10 [shape = 'u8[65536]{0}', space=vmem, size = 0x10000, scoped, tag = 'input window, operand 6, single buffered']
    #allocation11 [shape = 'u8[65536]{0}', space=vmem, size = 0x10000, scoped, tag = 'input window, operand 7, single buffered']
    #allocation12 [shape = 's32[1]{0}', space=sflag, size = 0x4, scoped, tag = 'scoped memory for tpu_custom_call.1']
    #allocation13 [shape = 'u8[65536]{0}', space=vmem, size = 0x10000, scoped, tag = 'input window, operand 8, single buffered']
    #allocation14 [shape = 'u8[65536]{0}', space=vmem, size = 0x10000, scoped, tag = 'input window, operand 9, single buffered']
    #allocation15 [shape = 's32[1]{0}', space=sflag, size = 0x4, scoped, tag = 'scoped memory for tpu_custom_call.1']
    #allocation16 [shape = 'u8[4096]{0}', space=vmem, size = 0x1000, scoped, tag = 'output window, operand 0, single buffered']
    #allocation17 [shape = 'u8[4096]{0}', space=vmem, size = 0x1000, scoped, tag = 'output window, operand 1, single buffered']
    #allocation18 [shape = 's32[1]{0}', space=sflag, size = 0x4, scoped, tag = 'scoped memory for tpu_custom_call.1']
    #allocation19 [shape = 'u8[4096]{0}', space=vmem, size = 0x1000, scoped, tag = 'output window, operand 2, single buffered']
    %19 = vsyncpa [#allocation3], 0
    %20 = vsyncpa [#allocation6], 0
    %21 = vsyncpa [#allocation9], 0
    %22 = vsyncpa [#allocation12], 0
    %23 = vsyncpa [#allocation15], 0
    %24 = vsyncpa [#allocation4], 0
    %25 = vsyncpa [#allocation18], 0
    // Predicated region
    $region2: #{tpu_custom_call.1} parent=1 // pred_check
      _
    $region3: #{tpu_custom_call.1} parent=1 // pred_check_branch
      %27 = sbr.rel (0) target = $region5
    $region4: #{tpu_custom_call.1} parent=1 // pred_region
      _
    $region5: #{tpu_custom_call.1} parent=1 // pred_fallthru
      _
    // Predicated region
    $region6: #{tpu_custom_call.1} parent=1 // pred_check
      _
    $region7: #{tpu_custom_call.1} parent=1 // pred_check_branch
      %29 = sbr.rel (0) target = $region9
    $region8: #{tpu_custom_call.1} parent=1 // pred_region
      %s31 = ssub.s32 128, 128
      %32 = vsyncadd [#allocation3], %s31
      %s34 = sshll.u32 [#allocation2], 4
      %s35 = int_to_ptr.vmem [resolvable:$true] %s34
      %37 = dma.hbm_to_vmem [thread:$0]  %s1, 128, %s35, [#allocation3]
    $region9: #{tpu_custom_call.1} parent=1 // pred_fallthru
      _
    // Predicated region
    $region10: #{tpu_custom_call.1} parent=1 // pred_check
      _
    $region11: #{tpu_custom_call.1} parent=1 // pred_check_branch
      %39 = sbr.rel (0) target = $region13
    $region12: #{tpu_custom_call.1} parent=1 // pred_region
      _
    $region13: #{tpu_custom_call.1} parent=1 // pred_fallthru
      _
    // Predicated region
    $region14: #{tpu_custom_call.1} parent=1 // pred_check
      _
    $region15: #{tpu_custom_call.1} parent=1 // pred_check_branch
      %41 = sbr.rel (0) target = $region17
    $region16: #{tpu_custom_call.1} parent=1 // pred_region
      %s43 = ssub.s32 2048, 2048
      %44 = vsyncadd [#allocation6], %s43
      %s45 = sshll.u32 [#allocation5], 4
      %s46 = int_to_ptr.vmem [resolvable:$true] %s45
      %51 = dma.hbm_to_vmem [thread:$0]  %s3, 2048, %s46, [#allocation6], 128, 128, 8
    $region17: #{tpu_custom_call.1} parent=1 // pred_fallthru
      _
    // Predicated region
    $region18: #{tpu_custom_call.1} parent=1 // pred_check
      _
    $region19: #{tpu_custom_call.1} parent=1 // pred_check_branch
      %53 = sbr.rel (0) target = $region21
    $region20: #{tpu_custom_call.1} parent=1 // pred_region
      %s55 = ssub.s32 2048, 2048
      %56 = vsyncadd [#allocation6], %s55
      %s57 = sshll.u32 [#allocation7], 4
      %s58 = int_to_ptr.vmem [resolvable:$true] %s57
      %63 = dma.hbm_to_vmem [thread:$0]  %s4, 2048, %s58, [#allocation6], 128, 128, 8
    $region21: #{tpu_custom_call.1} parent=1 // pred_fallthru
      _
    // Predicated region
    $region22: #{tpu_custom_call.1} parent=1 // pred_check
      _
    $region23: #{tpu_custom_call.1} parent=1 // pred_check_branch
      %65 = sbr.rel (0) target = $region25
    $region24: #{tpu_custom_call.1} parent=1 // pred_region
      %s67 = ssub.s32 4096, 4096
      %68 = vsyncadd [#allocation9], %s67
      %s69 = sshll.u32 [#allocation8], 4
      %s70 = int_to_ptr.vmem [resolvable:$true] %s69
      %75 = dma.hbm_to_vmem [thread:$0]  %s5, 4096, %s70, [#allocation9], 256, 256, 16
    $region25: #{tpu_custom_call.1} parent=1 // pred_fallthru
      _
    // Predicated region
    $region26: #{tpu_custom_call.1} parent=1 // pred_check
      _
    $region27: #{tpu_custom_call.1} parent=1 // pred_check_branch
      %77 = sbr.rel (0) target = $region29
    $region28: #{tpu_custom_call.1} parent=1 // pred_region
      %s79 = ssub.s32 2048, 2048
      %80 = vsyncadd [#allocation9], %s79
      %s81 = sshll.u32 [#allocation10], 4
      %s82 = int_to_ptr.vmem [resolvable:$true] %s81
      %87 = dma.hbm_to_vmem [thread:$0]  %s6, 2048, %s82, [#allocation9], 128, 128, 8
    $region29: #{tpu_custom_call.1} parent=1 // pred_fallthru
      _
    // Predicated region
    $region30: #{tpu_custom_call.1} parent=1 // pred_check
      _
    $region31: #{tpu_custom_call.1} parent=1 // pred_check_branch
      %89 = sbr.rel (0) target = $region33
    $region32: #{tpu_custom_call.1} parent=1 // pred_region
      %s91 = ssub.s32 2048, 2048
      %92 = vsyncadd [#allocation12], %s91
      %s93 = sshll.u32 [#allocation11], 4
      %s94 = int_to_ptr.vmem [resolvable:$true] %s93
      %99 = dma.hbm_to_vmem [thread:$0]  %s7, 2048, %s94, [#allocation12], 128, 128, 8
    $region33: #{tpu_custom_call.1} parent=1 // pred_fallthru
      _
    // Predicated region
    $region34: #{tpu_custom_call.1} parent=1 // pred_check
      _
    $region35: #{tpu_custom_call.1} parent=1 // pred_check_branch
      %101 = sbr.rel (0) target = $region37
    $region36: #{tpu_custom_call.1} parent=1 // pred_region
      %s103 = ssub.s32 2048, 2048
      %104 = vsyncadd [#allocation12], %s103
      %s105 = sshll.u32 [#allocation13], 4
      %s106 = int_to_ptr.vmem [resolvable:$true] %s105
      %111 = dma.hbm_to_vmem [thread:$0]  %s8, 2048, %s106, [#allocation12], 128, 128, 8
    $region37: #{tpu_custom_call.1} parent=1 // pred_fallthru
      _
    // Predicated region
    $region38: #{tpu_custom_call.1} parent=1 // pred_check
      _
    $region39: #{tpu_custom_call.1} parent=1 // pred_check_branch
      %113 = sbr.rel (0) target = $region41
    $region40: #{tpu_custom_call.1} parent=1 // pred_region
      %s115 = ssub.s32 2048, 2048
      %116 = vsyncadd [#allocation15], %s115
      %s117 = sshll.u32 [#allocation14], 4
      %s118 = int_to_ptr.vmem [resolvable:$true] %s117
      %123 = dma.hbm_to_vmem [thread:$0]  %s9, 2048, %s118, [#allocation15], 128, 128, 8
    $region41: #{tpu_custom_call.1} parent=1 // pred_fallthru
      _
    // Predicated region
    $region42: #{tpu_custom_call.1} parent=1 // pred_check
      _
    $region43: #{tpu_custom_call.1} parent=1 // pred_check_branch
      %125 = sbr.rel (0) target = $region45
    $region44: #{tpu_custom_call.1} parent=1 // pred_region
      _
    $region45: #{tpu_custom_call.1} parent=1 // pred_fallthru
      _
    // Predicated region
    $region46: #{tpu_custom_call.1} parent=1 // pred_check
      _
    $region47: #{tpu_custom_call.1} parent=1 // pred_check_branch
      %127 = sbr.rel (0) target = $region49
    $region48: #{tpu_custom_call.1} parent=1 // pred_region
      %128 = dma.done [#allocation3], 128
    $region49: #{tpu_custom_call.1} parent=1 // pred_fallthru
      _
    // Predicated region
    $region50: #{tpu_custom_call.1} parent=1 // pred_check
      _
    $region51: #{tpu_custom_call.1} parent=1 // pred_check_branch
      %130 = sbr.rel (0) target = $region53
    $region52: #{tpu_custom_call.1} parent=1 // pred_region
      %131 = dma.done [#allocation6], 2048
    $region53: #{tpu_custom_call.1} parent=1 // pred_fallthru
      _
    // Predicated region
    $region54: #{tpu_custom_call.1} parent=1 // pred_check
      _
    $region55: #{tpu_custom_call.1} parent=1 // pred_check_branch
      %133 = sbr.rel (0) target = $region57
    $region56: #{tpu_custom_call.1} parent=1 // pred_region
      %134 = dma.done [#allocation6], 2048
    $region57: #{tpu_custom_call.1} parent=1 // pred_fallthru
      _
    // Predicated region
    $region58: #{tpu_custom_call.1} parent=1 // pred_check
      _
    $region59: #{tpu_custom_call.1} parent=1 // pred_check_branch
      %136 = sbr.rel (0) target = $region61
    $region60: #{tpu_custom_call.1} parent=1 // pred_region
      %137 = dma.done [#allocation9], 4096
    $region61: #{tpu_custom_call.1} parent=1 // pred_fallthru
      _
    // Predicated region
    $region62: #{tpu_custom_call.1} parent=1 // pred_check
      _
    $region63: #{tpu_custom_call.1} parent=1 // pred_check_branch
      %139 = sbr.rel (0) target = $region65
    $region64: #{tpu_custom_call.1} parent=1 // pred_region
      %140 = dma.done [#allocation9], 2048
    $region65: #{tpu_custom_call.1} parent=1 // pred_fallthru
      _
    // Predicated region
    $region66: #{tpu_custom_call.1} parent=1 // pred_check
      _
    $region67: #{tpu_custom_call.1} parent=1 // pred_check_branch
      %142 = sbr.rel (0) target = $region69
    $region68: #{tpu_custom_call.1} parent=1 // pred_region
      %143 = dma.done [#allocation12], 2048
    $region69: #{tpu_custom_call.1} parent=1 // pred_fallthru
      _
    // Predicated region
    $region70: #{tpu_custom_call.1} parent=1 // pred_check
      _
    $region71: #{tpu_custom_call.1} parent=1 // pred_check_branch
      %145 = sbr.rel (0) target = $region73
    $region72: #{tpu_custom_call.1} parent=1 // pred_region
      %146 = dma.done [#allocation12], 2048
    $region73: #{tpu_custom_call.1} parent=1 // pred_fallthru
      _
    // Predicated region
    $region74: #{tpu_custom_call.1} parent=1 // pred_check
      _
    $region75: #{tpu_custom_call.1} parent=1 // pred_check_branch
      %148 = sbr.rel (0) target = $region77
    $region76: #{tpu_custom_call.1} parent=1 // pred_region
      %149 = dma.done [#allocation15], 2048
    $region77: #{tpu_custom_call.1} parent=1 // pred_fallthru
      _
    %v150 = vld [vmem:[%s10] sm:$0x1]
    %v151 = vld [vmem:[%s10 + $0x1] sm:$0x1]
    %v152 = vld [vmem:[%s10 + $0x2] sm:$0x1]
    %v153 = vld [vmem:[%s10 + $0x3] sm:$0x1]
    %v154 = vld [vmem:[%s10 + $0x4] sm:$0x1]
    %v155 = vld [vmem:[%s10 + $0x5] sm:$0x1]
    %v156 = vld [vmem:[%s0] sm:$0xff]
    %v157 = vld [vmem:[#allocation2] sm:$0xff]
    %v158 = vld [vmem:[#allocation5] sm:$0xff]
    %v159 = vld [vmem:[#allocation5 + $0x8] sm:$0xff]
    %v160 = vld [vmem:[#allocation5 + $0x10] sm:$0xff]
    %v161 = vld [vmem:[#allocation5 + $0x18] sm:$0xff]
    %v162 = vld [vmem:[#allocation5 + $0x20] sm:$0xff]
    %v163 = vld [vmem:[#allocation5 + $0x28] sm:$0xff]
    %v164 = vld [vmem:[#allocation5 + $0x30] sm:$0xff]
    %v165 = vld [vmem:[#allocation5 + $0x38] sm:$0xff]
    %v166 = vld [vmem:[#allocation5 + $0x40] sm:$0xff]
    %v167 = vld [vmem:[#allocation5 + $0x48] sm:$0xff]
    %v168 = vld [vmem:[#allocation5 + $0x50] sm:$0xff]
    %v169 = vld [vmem:[#allocation5 + $0x58] sm:$0xff]
    %v170 = vld [vmem:[#allocation5 + $0x60] sm:$0xff]
    %v171 = vld [vmem:[#allocation5 + $0x68] sm:$0xff]
    %v172 = vld [vmem:[#allocation5 + $0x70] sm:$0xff]
    %v173 = vld [vmem:[#allocation5 + $0x78] sm:$0xff]
    %v174 = vlaneseq
    %v175 = vshrl.u32 %v174, 7
    %v176 = vsub.s32 0, %v175
    %v177 = vrot.slane %v150, %v176
    %178 = vmatprep.subr.mxu0 0.0
    %179 = vmatpush1.msra.mxu0 %v173
    %180 = vmatprep.subr.mxu0 0.0
    %181 = vmatpush1.msra.mxu0 %v172
    %182 = vmatprep.subr.mxu0 0.0
    %183 = vmatpush1.msra.mxu0 %v171
    %184 = vmatprep.subr.mxu0 0.0
    %185 = vmatpush1.msra.mxu0 %v170
    %186 = vmatprep.subr.mxu0 0.0
    %187 = vmatpush1.msra.mxu0 %v169
    %188 = vmatprep.subr.mxu0 0.0
    %189 = vmatpush1.msra.mxu0 %v168
    %190 = vmatprep.subr.mxu0 0.0
    %191 = vmatpush1.msra.mxu0 %v167
    %192 = vmatprep.subr.mxu0 0.0
    %193 = vmatpush1.msra.mxu0 %v166
    %194 = vmatprep.subr.mxu0 0.0
    %195 = vmatpush1.msra.mxu0 %v165
    %196 = vmatprep.subr.mxu0 0.0
    %197 = vmatpush1.msra.mxu0 %v164
    %198 = vmatprep.subr.mxu0 0.0
    %199 = vmatpush1.msra.mxu0 %v163
    %200 = vmatprep.subr.mxu0 0.0
    %201 = vmatpush1.msra.mxu0 %v162
    %202 = vmatprep.subr.mxu0 0.0
    %203 = vmatpush1.msra.mxu0 %v161
    %204 = vmatprep.subr.mxu0 0.0
    %205 = vmatpush1.msra.mxu0 %v160
    %206 = vmatprep.subr.mxu0 0.0
    %207 = vmatpush1.msra.mxu0 %v159
    %208 = vmatprep.subr.mxu0 0.0
    %209 = vmatpush1.msra.mxu0 %v158
    %210 = vmatprep.subr.mxu0 0.0
    %211 = vmatpush2.msra.mxu0 0.0
    %212 = vmatprep.subr.mxu0 0.0
    %213 = vmatpush2.msra.mxu0 0.0
    %214 = vmatprep.subr.mxu0 0.0
    %215 = vmatpush2.msra.mxu0 0.0
    %216 = vmatprep.subr.mxu0 0.0
    %217 = vmatpush2.msra.mxu0 0.0
    %218 = vmatprep.subr.mxu0 0.0
    %219 = vmatpush2.msra.mxu0 0.0
    %220 = vmatprep.subr.mxu0 0.0
    %221 = vmatpush2.msra.mxu0 0.0
    %222 = vmatprep.subr.mxu0 0.0
    %223 = vmatpush2.msra.mxu0 0.0
    %224 = vmatprep.subr.mxu0 0.0
    %225 = vmatpush2.msra.mxu0 0.0
    %226 = vmatprep.subr.mxu0 0.0
    %227 = vmatpush2.msra.mxu0 0.0
    %228 = vmatprep.subr.mxu0 0.0
    %229 = vmatpush2.msra.mxu0 0.0
    %230 = vmatprep.subr.mxu0 0.0
    %231 = vmatpush2.msra.mxu0 0.0
    %232 = vmatprep.subr.mxu0 0.0
    %233 = vmatpush2.msra.mxu0 0.0
    %234 = vmatprep.subr.mxu0 0.0
    %235 = vmatpush2.msra.mxu0 0.0
    %236 = vmatprep.subr.mxu0 0.0
    %237 = vmatpush2.msra.mxu0 0.0
    %238 = vmatprep.subr.mxu0 0.0
    %239 = vmatpush2.msra.mxu0 0.0
    %240 = vmatprep.subr.mxu0 0.0
    %241 = vmatpush2.msra.mxu0 0.0
    %242 = vmatprep.mubr.f32.mxu0 0.0
    %243 = vmatmul.mubr.f32.gmra.mxu0 %v156
    %v244 = vpop.f32.mrf.mxu0
    %v245 = vadd.f32 %v177, %v244
    %v246 = vpop.f32.mrf.mxu0
    %247 = vmatprep.mubr.f32.mxu0 0.0
    %248 = vmatmul.mubr.f32.gmra.mxu0 %v157
    %v249 = vpop.f32.mrf.mxu0
    %v250 = vadd.f32 %v177, %v249
    %v251 = vpop.f32.mrf.mxu0
    %252 = vdwg.mxu0
    %vm253 = vcmp.gt.f32.partialorder %v245, 0.0
    %vm254 = vcmp.gt.f32.partialorder %v250, 0.0
    %v255 = vmul.f32 %v245, 0.01
    %v256 = vmul.f32 %v250, 0.01
    %v257 = vsel %vm253, %v245, %v255
    %v258 = vsel %vm254, %v250, %v256
    %v259 = vld [vmem:[#allocation7] sm:$0xff]
    %v260 = vld [vmem:[#allocation7 + $0x8] sm:$0xff]
    %v261 = vld [vmem:[#allocation7 + $0x10] sm:$0xff]
    %v262 = vld [vmem:[#allocation7 + $0x18] sm:$0xff]
    %v263 = vld [vmem:[#allocation7 + $0x20] sm:$0xff]
    %v264 = vld [vmem:[#allocation7 + $0x28] sm:$0xff]
    %v265 = vld [vmem:[#allocation7 + $0x30] sm:$0xff]
    %v266 = vld [vmem:[#allocation7 + $0x38] sm:$0xff]
    %v267 = vld [vmem:[#allocation7 + $0x40] sm:$0xff]
    %v268 = vld [vmem:[#allocation7 + $0x48] sm:$0xff]
    %v269 = vld [vmem:[#allocation7 + $0x50] sm:$0xff]
    %v270 = vld [vmem:[#allocation7 + $0x58] sm:$0xff]
    %v271 = vld [vmem:[#allocation7 + $0x60] sm:$0xff]
    %v272 = vld [vmem:[#allocation7 + $0x68] sm:$0xff]
    %v273 = vld [vmem:[#allocation7 + $0x70] sm:$0xff]
    %v274 = vld [vmem:[#allocation7 + $0x78] sm:$0xff]
    %v275 = vlaneseq
    %v276 = vshrl.u32 %v275, 7
    %v277 = vsub.s32 0, %v276
    %v278 = vrot.slane %v151, %v277
    %279 = vmatprep.subr.mxu0 0.0
    %280 = vmatpush1.msra.mxu0 %v274
    %281 = vmatprep.subr.mxu0 0.0
    %282 = vmatpush1.msra.mxu0 %v273
    %283 = vmatprep.subr.mxu0 0.0
    %284 = vmatpush1.msra.mxu0 %v272
    %285 = vmatprep.subr.mxu0 0.0
    %286 = vmatpush1.msra.mxu0 %v271
    %287 = vmatprep.subr.mxu0 0.0
    %288 = vmatpush1.msra.mxu0 %v270
    %289 = vmatprep.subr.mxu0 0.0
    %290 = vmatpush1.msra.mxu0 %v269
    %291 = vmatprep.subr.mxu0 0.0
    %292 = vmatpush1.msra.mxu0 %v268
    %293 = vmatprep.subr.mxu0 0.0
    %294 = vmatpush1.msra.mxu0 %v267
    %295 = vmatprep.subr.mxu0 0.0
    %296 = vmatpush1.msra.mxu0 %v266
    %297 = vmatprep.subr.mxu0 0.0
    %298 = vmatpush1.msra.mxu0 %v265
    %299 = vmatprep.subr.mxu0 0.0
    %300 = vmatpush1.msra.mxu0 %v264
    %301 = vmatprep.subr.mxu0 0.0
    %302 = vmatpush1.msra.mxu0 %v263
    %303 = vmatprep.subr.mxu0 0.0
    %304 = vmatpush1.msra.mxu0 %v262
    %305 = vmatprep.subr.mxu0 0.0
    %306 = vmatpush1.msra.mxu0 %v261
    %307 = vmatprep.subr.mxu0 0.0
    %308 = vmatpush1.msra.mxu0 %v260
    %309 = vmatprep.subr.mxu0 0.0
    %310 = vmatpush1.msra.mxu0 %v259
    %311 = vmatprep.subr.mxu0 0.0
    %312 = vmatpush2.msra.mxu0 0.0
    %313 = vmatprep.subr.mxu0 0.0
    %314 = vmatpush2.msra.mxu0 0.0
    %315 = vmatprep.subr.mxu0 0.0
    %316 = vmatpush2.msra.mxu0 0.0
    %317 = vmatprep.subr.mxu0 0.0
    %318 = vmatpush2.msra.mxu0 0.0
    %319 = vmatprep.subr.mxu0 0.0
    %320 = vmatpush2.msra.mxu0 0.0
    %321 = vmatprep.subr.mxu0 0.0
    %322 = vmatpush2.msra.mxu0 0.0
    %323 = vmatprep.subr.mxu0 0.0
    %324 = vmatpush2.msra.mxu0 0.0
    %325 = vmatprep.subr.mxu0 0.0
    %326 = vmatpush2.msra.mxu0 0.0
    %327 = vmatprep.subr.mxu0 0.0
    %328 = vmatpush2.msra.mxu0 0.0
    %329 = vmatprep.subr.mxu0 0.0
    %330 = vmatpush2.msra.mxu0 0.0
    %331 = vmatprep.subr.mxu0 0.0
    %332 = vmatpush2.msra.mxu0 0.0
    %333 = vmatprep.subr.mxu0 0.0
    %334 = vmatpush2.msra.mxu0 0.0
    %335 = vmatprep.subr.mxu0 0.0
    %336 = vmatpush2.msra.mxu0 0.0
    %337 = vmatprep.subr.mxu0 0.0
    %338 = vmatpush2.msra.mxu0 0.0
    %339 = vmatprep.subr.mxu0 0.0
    %340 = vmatpush2.msra.mxu0 0.0
    %341 = vmatprep.subr.mxu0 0.0
    %342 = vmatpush2.msra.mxu0 0.0
    %343 = vmatprep.mubr.f32.mxu0 0.0
    %344 = vmatmul.mubr.f32.gmra.mxu0 %v257
    %v345 = vpop.f32.mrf.mxu0
    %v346 = vadd.f32 %v278, %v345
    %v347 = vpop.f32.mrf.mxu0
    %348 = vmatprep.mubr.f32.mxu0 0.0
    %349 = vmatmul.mubr.f32.gmra.mxu0 %v258
    %v350 = vpop.f32.mrf.mxu0
    %v351 = vadd.f32 %v278, %v350
    %v352 = vpop.f32.mrf.mxu0
    %353 = vdwg.mxu0
    %v354 = vlaneseq
    %v355 = vand.u32 %v354, 127
    %v356 = vld [vmem:[%s2] sm:$0xff]
    %357 = vset.pattern.permute.xlu0 0
    %358 = vperm.xlu0 %357, %v356
    %v359 = vpop.permute.xlu0 %358
    %vm360 = vcmp.eq.s32.totalorder %v355, %v359
    %v361 = vsel %vm360, 1, 0
    %v362 = vcvt.s32.f32 %v361
    %v363 = vld [vmem:[#allocation8] sm:$0xff]
    %v364 = vld [vmem:[#allocation8 + $0x8] sm:$0xff]
    %v365 = vld [vmem:[#allocation8 + $0x10] sm:$0xff]
    %v366 = vld [vmem:[#allocation8 + $0x18] sm:$0xff]
    %v367 = vld [vmem:[#allocation8 + $0x20] sm:$0xff]
    %v368 = vld [vmem:[#allocation8 + $0x28] sm:$0xff]
    %v369 = vld [vmem:[#allocation8 + $0x30] sm:$0xff]
    %v370 = vld [vmem:[#allocation8 + $0x38] sm:$0xff]
    %v371 = vld [vmem:[#allocation8 + $0x40] sm:$0xff]
    %v372 = vld [vmem:[#allocation8 + $0x48] sm:$0xff]
    %v373 = vld [vmem:[#allocation8 + $0x50] sm:$0xff]
    %v374 = vld [vmem:[#allocation8 + $0x58] sm:$0xff]
    %v375 = vld [vmem:[#allocation8 + $0x60] sm:$0xff]
    %v376 = vld [vmem:[#allocation8 + $0x68] sm:$0xff]
    %v377 = vld [vmem:[#allocation8 + $0x70] sm:$0xff]
    %v378 = vld [vmem:[#allocation8 + $0x78] sm:$0xff]
    %v379 = vld [vmem:[#allocation8 + $0x80] sm:$0xff]
    %v380 = vld [vmem:[#allocation8 + $0x88] sm:$0xff]
    %v381 = vld [vmem:[#allocation8 + $0x90] sm:$0xff]
    %v382 = vld [vmem:[#allocation8 + $0x98] sm:$0xff]
    %v383 = vld [vmem:[#allocation8 + $0xa0] sm:$0xff]
    %v384 = vld [vmem:[#allocation8 + $0xa8] sm:$0xff]
    %v385 = vld [vmem:[#allocation8 + $0xb0] sm:$0xff]
    %v386 = vld [vmem:[#allocation8 + $0xb8] sm:$0xff]
    %v387 = vld [vmem:[#allocation8 + $0xc0] sm:$0xff]
    %v388 = vld [vmem:[#allocation8 + $0xc8] sm:$0xff]
    %v389 = vld [vmem:[#allocation8 + $0xd0] sm:$0xff]
    %v390 = vld [vmem:[#allocation8 + $0xd8] sm:$0xff]
    %v391 = vld [vmem:[#allocation8 + $0xe0] sm:$0xff]
    %v392 = vld [vmem:[#allocation8 + $0xe8] sm:$0xff]
    %v393 = vld [vmem:[#allocation8 + $0xf0] sm:$0xff]
    %v394 = vld [vmem:[#allocation8 + $0xf8] sm:$0xff]
    %395 = vmatprep.subr.mxu0 %v394
    %396 = vmatpush1.msra.mxu0 %v393
    %397 = vmatprep.subr.mxu0 %v392
    %398 = vmatpush1.msra.mxu0 %v391
    %399 = vmatprep.subr.mxu0 %v390
    %400 = vmatpush1.msra.mxu0 %v389
    %401 = vmatprep.subr.mxu0 %v388
    %402 = vmatpush1.msra.mxu0 %v387
    %403 = vmatprep.subr.mxu0 %v386
    %404 = vmatpush1.msra.mxu0 %v385
    %405 = vmatprep.subr.mxu0 %v384
    %406 = vmatpush1.msra.mxu0 %v383
    %407 = vmatprep.subr.mxu0 %v382
    %408 = vmatpush1.msra.mxu0 %v381
    %409 = vmatprep.subr.mxu0 %v380
    %410 = vmatpush1.msra.mxu0 %v379
    %411 = vmatprep.subr.mxu0 %v378
    %412 = vmatpush1.msra.mxu0 %v377
    %413 = vmatprep.subr.mxu0 %v376
    %414 = vmatpush1.msra.mxu0 %v375
    %415 = vmatprep.subr.mxu0 %v374
    %416 = vmatpush1.msra.mxu0 %v373
    %417 = vmatprep.subr.mxu0 %v372
    %418 = vmatpush1.msra.mxu0 %v371
    %419 = vmatprep.subr.mxu0 %v370
    %420 = vmatpush1.msra.mxu0 %v369
    %421 = vmatprep.subr.mxu0 %v368
    %422 = vmatpush1.msra.mxu0 %v367
    %423 = vmatprep.subr.mxu0 %v366
    %424 = vmatpush1.msra.mxu0 %v365
    %425 = vmatprep.subr.mxu0 %v364
    %426 = vmatpush1.msra.mxu0 %v363
    %427 = vmatprep.subr.mxu0 0.0
    %428 = vmatpush2.msra.mxu0 0.0
    %429 = vmatprep.subr.mxu0 0.0
    %430 = vmatpush2.msra.mxu0 0.0
    %431 = vmatprep.subr.mxu0 0.0
    %432 = vmatpush2.msra.mxu0 0.0
    %433 = vmatprep.subr.mxu0 0.0
    %434 = vmatpush2.msra.mxu0 0.0
    %435 = vmatprep.subr.mxu0 0.0
    %436 = vmatpush2.msra.mxu0 0.0
    %437 = vmatprep.subr.mxu0 0.0
    %438 = vmatpush2.msra.mxu0 0.0
    %439 = vmatprep.subr.mxu0 0.0
    %440 = vmatpush2.msra.mxu0 0.0
    %441 = vmatprep.subr.mxu0 0.0
    %442 = vmatpush2.msra.mxu0 0.0
    %443 = vmatprep.subr.mxu0 0.0
    %444 = vmatpush2.msra.mxu0 0.0
    %445 = vmatprep.subr.mxu0 0.0
    %446 = vmatpush2.msra.mxu0 0.0
    %447 = vmatprep.subr.mxu0 0.0
    %448 = vmatpush2.msra.mxu0 0.0
    %449 = vmatprep.subr.mxu0 0.0
    %450 = vmatpush2.msra.mxu0 0.0
    %451 = vmatprep.subr.mxu0 0.0
    %452 = vmatpush2.msra.mxu0 0.0
    %453 = vmatprep.subr.mxu0 0.0
    %454 = vmatpush2.msra.mxu0 0.0
    %455 = vmatprep.subr.mxu0 0.0
    %456 = vmatpush2.msra.mxu0 0.0
    %457 = vmatprep.subr.mxu0 0.0
    %458 = vmatpush2.msra.mxu0 0.0
    %459 = vmatprep.mubr.f32.mxu0 0.0
    %460 = vmatmul.mubr.f32.gmra.mxu0 %v346
    %v461 = vpop.f32.mrf.mxu0
    %v462 = vadd.f32 0.0, %v461
    %v463 = vpop.f32.mrf.mxu0
    %v464 = vadd.f32 0.0, %v463
    %465 = vdwg.mxu0
    %v466 = vld [vmem:[#allocation10] sm:$0xff]
    %v467 = vld [vmem:[#allocation10 + $0x8] sm:$0xff]
    %v468 = vld [vmem:[#allocation10 + $0x10] sm:$0xff]
    %v469 = vld [vmem:[#allocation10 + $0x18] sm:$0xff]
    %v470 = vld [vmem:[#allocation10 + $0x20] sm:$0xff]
    %v471 = vld [vmem:[#allocation10 + $0x28] sm:$0xff]
    %v472 = vld [vmem:[#allocation10 + $0x30] sm:$0xff]
    %v473 = vld [vmem:[#allocation10 + $0x38] sm:$0xff]
    %v474 = vld [vmem:[#allocation10 + $0x40] sm:$0xff]
    %v475 = vld [vmem:[#allocation10 + $0x48] sm:$0xff]
    %v476 = vld [vmem:[#allocation10 + $0x50] sm:$0xff]
    %v477 = vld [vmem:[#allocation10 + $0x58] sm:$0xff]
    %v478 = vld [vmem:[#allocation10 + $0x60] sm:$0xff]
    %v479 = vld [vmem:[#allocation10 + $0x68] sm:$0xff]
    %v480 = vld [vmem:[#allocation10 + $0x70] sm:$0xff]
    %v481 = vld [vmem:[#allocation10 + $0x78] sm:$0xff]
    %482 = vmatprep.subr.mxu0 0.0
    %483 = vmatpush1.msra.mxu0 %v481
    %484 = vmatprep.subr.mxu0 0.0
    %485 = vmatpush1.msra.mxu0 %v480
    %486 = vmatprep.subr.mxu0 0.0
    %487 = vmatpush1.msra.mxu0 %v479
    %488 = vmatprep.subr.mxu0 0.0
    %489 = vmatpush1.msra.mxu0 %v478
    %490 = vmatprep.subr.mxu0 0.0
    %491 = vmatpush1.msra.mxu0 %v477
    %492 = vmatprep.subr.mxu0 0.0
    %493 = vmatpush1.msra.mxu0 %v476
    %494 = vmatprep.subr.mxu0 0.0
    %495 = vmatpush1.msra.mxu0 %v475
    %496 = vmatprep.subr.mxu0 0.0
    %497 = vmatpush1.msra.mxu0 %v474
    %498 = vmatprep.subr.mxu0 0.0
    %499 = vmatpush1.msra.mxu0 %v473
    %500 = vmatprep.subr.mxu0 0.0
    %501 = vmatpush1.msra.mxu0 %v472
    %502 = vmatprep.subr.mxu0 0.0
    %503 = vmatpush1.msra.mxu0 %v471
    %504 = vmatprep.subr.mxu0 0.0
    %505 = vmatpush1.msra.mxu0 %v470
    %506 = vmatprep.subr.mxu0 0.0
    %507 = vmatpush1.msra.mxu0 %v469
    %508 = vmatprep.subr.mxu0 0.0
    %509 = vmatpush1.msra.mxu0 %v468
    %510 = vmatprep.subr.mxu0 0.0
    %511 = vmatpush1.msra.mxu0 %v467
    %512 = vmatprep.subr.mxu0 0.0
    %513 = vmatpush1.msra.mxu0 %v466
    %514 = vmatprep.subr.mxu0 0.0
    %515 = vmatpush2.msra.mxu0 0.0
    %516 = vmatprep.subr.mxu0 0.0
    %517 = vmatpush2.msra.mxu0 0.0
    %518 = vmatprep.subr.mxu0 0.0
    %519 = vmatpush2.msra.mxu0 0.0
    %520 = vmatprep.subr.mxu0 0.0
    %521 = vmatpush2.msra.mxu0 0.0
    %522 = vmatprep.subr.mxu0 0.0
    %523 = vmatpush2.msra.mxu0 0.0
    %524 = vmatprep.subr.mxu0 0.0
    %525 = vmatpush2.msra.mxu0 0.0
    %526 = vmatprep.subr.mxu0 0.0
    %527 = vmatpush2.msra.mxu0 0.0
    %528 = vmatprep.subr.mxu0 0.0
    %529 = vmatpush2.msra.mxu0 0.0
    %530 = vmatprep.subr.mxu0 0.0
    %531 = vmatpush2.msra.mxu0 0.0
    %532 = vmatprep.subr.mxu0 0.0
    %533 = vmatpush2.msra.mxu0 0.0
    %534 = vmatprep.subr.mxu0 0.0
    %535 = vmatpush2.msra.mxu0 0.0
    %536 = vmatprep.subr.mxu0 0.0
    %537 = vmatpush2.msra.mxu0 0.0
    %538 = vmatprep.subr.mxu0 0.0
    %539 = vmatpush2.msra.mxu0 0.0
    %540 = vmatprep.subr.mxu0 0.0
    %541 = vmatpush2.msra.mxu0 0.0
    %542 = vmatprep.subr.mxu0 0.0
    %543 = vmatpush2.msra.mxu0 0.0
    %544 = vmatprep.subr.mxu0 0.0
    %545 = vmatpush2.msra.mxu0 0.0
    %546 = vmatprep.mubr.f32.mxu0 0.0
    %547 = vmatmul.mubr.f32.gmra.mxu0 %v351
    %v548 = vpop.f32.mrf.mxu0
    %v549 = vadd.f32 0.0, %v548
    %v550 = vpop.f32.mrf.mxu0
    %551 = vdwg.mxu0
    %v552 = vadd.f32 %v462, %v549
    %v553 = vlaneseq
    %v554 = vshrl.u32 %v553, 7
    %v555 = vsub.s32 0, %v554
    %v556 = vrot.slane %v152, %v555
    %v557 = vadd.f32 %v552, %v556
    %vm558 = vcmp.gt.f32.partialorder %v557, 0.0
    %v559 = vmul.f32 %v557, 0.01
    %v560 = vsel %vm558, %v557, %v559
    %v561 = vld [vmem:[#allocation11] sm:$0xff]
    %v562 = vld [vmem:[#allocation11 + $0x8] sm:$0xff]
    %v563 = vld [vmem:[#allocation11 + $0x10] sm:$0xff]
    %v564 = vld [vmem:[#allocation11 + $0x18] sm:$0xff]
    %v565 = vld [vmem:[#allocation11 + $0x20] sm:$0xff]
    %v566 = vld [vmem:[#allocation11 + $0x28] sm:$0xff]
    %v567 = vld [vmem:[#allocation11 + $0x30] sm:$0xff]
    %v568 = vld [vmem:[#allocation11 + $0x38] sm:$0xff]
    %v569 = vld [vmem:[#allocation11 + $0x40] sm:$0xff]
    %v570 = vld [vmem:[#allocation11 + $0x48] sm:$0xff]
    %v571 = vld [vmem:[#allocation11 + $0x50] sm:$0xff]
    %v572 = vld [vmem:[#allocation11 + $0x58] sm:$0xff]
    %v573 = vld [vmem:[#allocation11 + $0x60] sm:$0xff]
    %v574 = vld [vmem:[#allocation11 + $0x68] sm:$0xff]
    %v575 = vld [vmem:[#allocation11 + $0x70] sm:$0xff]
    %v576 = vld [vmem:[#allocation11 + $0x78] sm:$0xff]
    %577 = vmatprep.subr.mxu0 0.0
    %578 = vmatpush1.msra.mxu0 %v576
    %579 = vmatprep.subr.mxu0 0.0
    %580 = vmatpush1.msra.mxu0 %v575
    %581 = vmatprep.subr.mxu0 0.0
    %582 = vmatpush1.msra.mxu0 %v574
    %583 = vmatprep.subr.mxu0 0.0
    %584 = vmatpush1.msra.mxu0 %v573
    %585 = vmatprep.subr.mxu0 0.0
    %586 = vmatpush1.msra.mxu0 %v572
    %587 = vmatprep.subr.mxu0 0.0
    %588 = vmatpush1.msra.mxu0 %v571
    %589 = vmatprep.subr.mxu0 0.0
    %590 = vmatpush1.msra.mxu0 %v570
    %591 = vmatprep.subr.mxu0 0.0
    %592 = vmatpush1.msra.mxu0 %v569
    %593 = vmatprep.subr.mxu0 0.0
    %594 = vmatpush1.msra.mxu0 %v568
    %595 = vmatprep.subr.mxu0 0.0
    %596 = vmatpush1.msra.mxu0 %v567
    %597 = vmatprep.subr.mxu0 0.0
    %598 = vmatpush1.msra.mxu0 %v566
    %599 = vmatprep.subr.mxu0 0.0
    %600 = vmatpush1.msra.mxu0 %v565
    %601 = vmatprep.subr.mxu0 0.0
    %602 = vmatpush1.msra.mxu0 %v564
    %603 = vmatprep.subr.mxu0 0.0
    %604 = vmatpush1.msra.mxu0 %v563
    %605 = vmatprep.subr.mxu0 0.0
    %606 = vmatpush1.msra.mxu0 %v562
    %607 = vmatprep.subr.mxu0 0.0
    %608 = vmatpush1.msra.mxu0 %v561
    %609 = vmatprep.subr.mxu0 0.0
    %610 = vmatpush2.msra.mxu0 0.0
    %611 = vmatprep.subr.mxu0 0.0
    %612 = vmatpush2.msra.mxu0 0.0
    %613 = vmatprep.subr.mxu0 0.0
    %614 = vmatpush2.msra.mxu0 0.0
    %615 = vmatprep.subr.mxu0 0.0
    %616 = vmatpush2.msra.mxu0 0.0
    %617 = vmatprep.subr.mxu0 0.0
    %618 = vmatpush2.msra.mxu0 0.0
    %619 = vmatprep.subr.mxu0 0.0
    %620 = vmatpush2.msra.mxu0 0.0
    %621 = vmatprep.subr.mxu0 0.0
    %622 = vmatpush2.msra.mxu0 0.0
    %623 = vmatprep.subr.mxu0 0.0
    %624 = vmatpush2.msra.mxu0 0.0
    %625 = vmatprep.subr.mxu0 0.0
    %626 = vmatpush2.msra.mxu0 0.0
    %627 = vmatprep.subr.mxu0 0.0
    %628 = vmatpush2.msra.mxu0 0.0
    %629 = vmatprep.subr.mxu0 0.0
    %630 = vmatpush2.msra.mxu0 0.0
    %631 = vmatprep.subr.mxu0 0.0
    %632 = vmatpush2.msra.mxu0 0.0
    %633 = vmatprep.subr.mxu0 0.0
    %634 = vmatpush2.msra.mxu0 0.0
    %635 = vmatprep.subr.mxu0 0.0
    %636 = vmatpush2.msra.mxu0 0.0
    %637 = vmatprep.subr.mxu0 0.0
    %638 = vmatpush2.msra.mxu0 0.0
    %639 = vmatprep.subr.mxu0 0.0
    %640 = vmatpush2.msra.mxu0 0.0
    %641 = vmatprep.mubr.f32.mxu0 0.0
    %642 = vmatmul.mubr.f32.gmra.mxu0 %v362
    %v643 = vpop.f32.mrf.mxu0
    %v644 = vadd.f32 0.0, %v643
    %v645 = vpop.f32.mrf.mxu0
    %646 = vdwg.mxu0
    %v647 = vadd.f32 %v464, %v644
    %v648 = vlaneseq
    %v649 = vshrl.u32 %v648, 7
    %v650 = vsub.s32 0, %v649
    %v651 = vrot.slane %v153, %v650
    %v652 = vadd.f32 %v647, %v651
    %vm653 = vcmp.gt.f32.partialorder %v652, 0.0
    %v654 = vmul.f32 %v652, 0.01
    %v655 = vsel %vm653, %v652, %v654
    %v656 = vld [vmem:[#allocation13] sm:$0xff]
    %v657 = vld [vmem:[#allocation13 + $0x8] sm:$0xff]
    %v658 = vld [vmem:[#allocation13 + $0x10] sm:$0xff]
    %v659 = vld [vmem:[#allocation13 + $0x18] sm:$0xff]
    %v660 = vld [vmem:[#allocation13 + $0x20] sm:$0xff]
    %v661 = vld [vmem:[#allocation13 + $0x28] sm:$0xff]
    %v662 = vld [vmem:[#allocation13 + $0x30] sm:$0xff]
    %v663 = vld [vmem:[#allocation13 + $0x38] sm:$0xff]
    %v664 = vld [vmem:[#allocation13 + $0x40] sm:$0xff]
    %v665 = vld [vmem:[#allocation13 + $0x48] sm:$0xff]
    %v666 = vld [vmem:[#allocation13 + $0x50] sm:$0xff]
    %v667 = vld [vmem:[#allocation13 + $0x58] sm:$0xff]
    %v668 = vld [vmem:[#allocation13 + $0x60] sm:$0xff]
    %v669 = vld [vmem:[#allocation13 + $0x68] sm:$0xff]
    %v670 = vld [vmem:[#allocation13 + $0x70] sm:$0xff]
    %v671 = vld [vmem:[#allocation13 + $0x78] sm:$0xff]
    %v672 = vlaneseq
    %v673 = vshrl.u32 %v672, 7
    %v674 = vsub.s32 0, %v673
    %v675 = vrot.slane %v154, %v674
    %676 = vmatprep.subr.mxu0 0.0
    %677 = vmatpush1.msra.mxu0 %v671
    %678 = vmatprep.subr.mxu0 0.0
    %679 = vmatpush1.msra.mxu0 %v670
    %680 = vmatprep.subr.mxu0 0.0
    %681 = vmatpush1.msra.mxu0 %v669
    %682 = vmatprep.subr.mxu0 0.0
    %683 = vmatpush1.msra.mxu0 %v668
    %684 = vmatprep.subr.mxu0 0.0
    %685 = vmatpush1.msra.mxu0 %v667
    %686 = vmatprep.subr.mxu0 0.0
    %687 = vmatpush1.msra.mxu0 %v666
    %688 = vmatprep.subr.mxu0 0.0
    %689 = vmatpush1.msra.mxu0 %v665
    %690 = vmatprep.subr.mxu0 0.0
    %691 = vmatpush1.msra.mxu0 %v664
    %692 = vmatprep.subr.mxu0 0.0
    %693 = vmatpush1.msra.mxu0 %v663
    %694 = vmatprep.subr.mxu0 0.0
    %695 = vmatpush1.msra.mxu0 %v662
    %696 = vmatprep.subr.mxu0 0.0
    %697 = vmatpush1.msra.mxu0 %v661
    %698 = vmatprep.subr.mxu0 0.0
    %699 = vmatpush1.msra.mxu0 %v660
    %700 = vmatprep.subr.mxu0 0.0
    %701 = vmatpush1.msra.mxu0 %v659
    %702 = vmatprep.subr.mxu0 0.0
    %703 = vmatpush1.msra.mxu0 %v658
    %704 = vmatprep.subr.mxu0 0.0
    %705 = vmatpush1.msra.mxu0 %v657
    %706 = vmatprep.subr.mxu0 0.0
    %707 = vmatpush1.msra.mxu0 %v656
    %708 = vmatprep.subr.mxu0 0.0
    %709 = vmatpush2.msra.mxu0 0.0
    %710 = vmatprep.subr.mxu0 0.0
    %711 = vmatpush2.msra.mxu0 0.0
    %712 = vmatprep.subr.mxu0 0.0
    %713 = vmatpush2.msra.mxu0 0.0
    %714 = vmatprep.subr.mxu0 0.0
    %715 = vmatpush2.msra.mxu0 0.0
    %716 = vmatprep.subr.mxu0 0.0
    %717 = vmatpush2.msra.mxu0 0.0
    %718 = vmatprep.subr.mxu0 0.0
    %719 = vmatpush2.msra.mxu0 0.0
    %720 = vmatprep.subr.mxu0 0.0
    %721 = vmatpush2.msra.mxu0 0.0
    %722 = vmatprep.subr.mxu0 0.0
    %723 = vmatpush2.msra.mxu0 0.0
    %724 = vmatprep.subr.mxu0 0.0
    %725 = vmatpush2.msra.mxu0 0.0
    %726 = vmatprep.subr.mxu0 0.0
    %727 = vmatpush2.msra.mxu0 0.0
    %728 = vmatprep.subr.mxu0 0.0
    %729 = vmatpush2.msra.mxu0 0.0
    %730 = vmatprep.subr.mxu0 0.0
    %731 = vmatpush2.msra.mxu0 0.0
    %732 = vmatprep.subr.mxu0 0.0
    %733 = vmatpush2.msra.mxu0 0.0
    %734 = vmatprep.subr.mxu0 0.0
    %735 = vmatpush2.msra.mxu0 0.0
    %736 = vmatprep.subr.mxu0 0.0
    %737 = vmatpush2.msra.mxu0 0.0
    %738 = vmatprep.subr.mxu0 0.0
    %739 = vmatpush2.msra.mxu0 0.0
    %740 = vmatprep.mubr.f32.mxu0 0.0
    %741 = vmatmul.mubr.f32.gmra.mxu0 %v560
    %v742 = vpop.f32.mrf.mxu0
    %v743 = vadd.f32 %v675, %v742
    %v744 = vpop.f32.mrf.mxu0
    %745 = vdwg.mxu0
    %v746 = vld [vmem:[#allocation14] sm:$0xff]
    %v747 = vld [vmem:[#allocation14 + $0x8] sm:$0xff]
    %v748 = vld [vmem:[#allocation14 + $0x10] sm:$0xff]
    %v749 = vld [vmem:[#allocation14 + $0x18] sm:$0xff]
    %v750 = vld [vmem:[#allocation14 + $0x20] sm:$0xff]
    %v751 = vld [vmem:[#allocation14 + $0x28] sm:$0xff]
    %v752 = vld [vmem:[#allocation14 + $0x30] sm:$0xff]
    %v753 = vld [vmem:[#allocation14 + $0x38] sm:$0xff]
    %v754 = vld [vmem:[#allocation14 + $0x40] sm:$0xff]
    %v755 = vld [vmem:[#allocation14 + $0x48] sm:$0xff]
    %v756 = vld [vmem:[#allocation14 + $0x50] sm:$0xff]
    %v757 = vld [vmem:[#allocation14 + $0x58] sm:$0xff]
    %v758 = vld [vmem:[#allocation14 + $0x60] sm:$0xff]
    %v759 = vld [vmem:[#allocation14 + $0x68] sm:$0xff]
    %v760 = vld [vmem:[#allocation14 + $0x70] sm:$0xff]
    %v761 = vld [vmem:[#allocation14 + $0x78] sm:$0xff]
    %v762 = vlaneseq
    %v763 = vshrl.u32 %v762, 7
    %v764 = vsub.s32 0, %v763
    %v765 = vrot.slane %v155, %v764
    %766 = vmatprep.subr.mxu0 0.0
    %767 = vmatpush1.msra.mxu0 %v761
    %768 = vmatprep.subr.mxu0 0.0
    %769 = vmatpush1.msra.mxu0 %v760
    %770 = vmatprep.subr.mxu0 0.0
    %771 = vmatpush1.msra.mxu0 %v759
    %772 = vmatprep.subr.mxu0 0.0
    %773 = vmatpush1.msra.mxu0 %v758
    %774 = vmatprep.subr.mxu0 0.0
    %775 = vmatpush1.msra.mxu0 %v757
    %776 = vmatprep.subr.mxu0 0.0
    %777 = vmatpush1.msra.mxu0 %v756
    %778 = vmatprep.subr.mxu0 0.0
    %779 = vmatpush1.msra.mxu0 %v755
    %780 = vmatprep.subr.mxu0 0.0
    %781 = vmatpush1.msra.mxu0 %v754
    %782 = vmatprep.subr.mxu0 0.0
    %783 = vmatpush1.msra.mxu0 %v753
    %784 = vmatprep.subr.mxu0 0.0
    %785 = vmatpush1.msra.mxu0 %v752
    %786 = vmatprep.subr.mxu0 0.0
    %787 = vmatpush1.msra.mxu0 %v751
    %788 = vmatprep.subr.mxu0 0.0
    %789 = vmatpush1.msra.mxu0 %v750
    %790 = vmatprep.subr.mxu0 0.0
    %791 = vmatpush1.msra.mxu0 %v749
    %792 = vmatprep.subr.mxu0 0.0
    %793 = vmatpush1.msra.mxu0 %v748
    %794 = vmatprep.subr.mxu0 0.0
    %795 = vmatpush1.msra.mxu0 %v747
    %796 = vmatprep.subr.mxu0 0.0
    %797 = vmatpush1.msra.mxu0 %v746
    %798 = vmatprep.subr.mxu0 0.0
    %799 = vmatpush2.msra.mxu0 0.0
    %800 = vmatprep.subr.mxu0 0.0
    %801 = vmatpush2.msra.mxu0 0.0
    %802 = vmatprep.subr.mxu0 0.0
    %803 = vmatpush2.msra.mxu0 0.0
    %804 = vmatprep.subr.mxu0 0.0
    %805 = vmatpush2.msra.mxu0 0.0
    %806 = vmatprep.subr.mxu0 0.0
    %807 = vmatpush2.msra.mxu0 0.0
    %808 = vmatprep.subr.mxu0 0.0
    %809 = vmatpush2.msra.mxu0 0.0
    %810 = vmatprep.subr.mxu0 0.0
    %811 = vmatpush2.msra.mxu0 0.0
    %812 = vmatprep.subr.mxu0 0.0
    %813 = vmatpush2.msra.mxu0 0.0
    %814 = vmatprep.subr.mxu0 0.0
    %815 = vmatpush2.msra.mxu0 0.0
    %816 = vmatprep.subr.mxu0 0.0
    %817 = vmatpush2.msra.mxu0 0.0
    %818 = vmatprep.subr.mxu0 0.0
    %819 = vmatpush2.msra.mxu0 0.0
    %820 = vmatprep.subr.mxu0 0.0
    %821 = vmatpush2.msra.mxu0 0.0
    %822 = vmatprep.subr.mxu0 0.0
    %823 = vmatpush2.msra.mxu0 0.0
    %824 = vmatprep.subr.mxu0 0.0
    %825 = vmatpush2.msra.mxu0 0.0
    %826 = vmatprep.subr.mxu0 0.0
    %827 = vmatpush2.msra.mxu0 0.0
    %828 = vmatprep.subr.mxu0 0.0
    %829 = vmatpush2.msra.mxu0 0.0
    %830 = vmatprep.mubr.f32.mxu0 0.0
    %831 = vmatmul.mubr.f32.gmra.mxu0 %v655
    %v832 = vpop.f32.mrf.mxu0
    %v833 = vadd.f32 %v765, %v832
    %v834 = vpop.f32.mrf.mxu0
    %835 = vdwg.mxu0
    %836 = vst [vmem:[#allocation16] sm:$0xff] %v743
    %837 = vst [vmem:[#allocation17] sm:$0xff] %v833
    %838 = vst [vmem:[#allocation19] sm:$0xff] %v351
    // Predicated region
    $region78: #{tpu_custom_call.1} parent=1 // pred_check
      _
    $region79: #{tpu_custom_call.1} parent=1 // pred_check_branch
      %840 = sbr.rel (0) target = $region81
    $region80: #{tpu_custom_call.1} parent=1 // pred_region
      %s842 = ssub.s32 128, 128
      %843 = vsyncadd [#allocation4], %s842
      %s845 = sshll.u32 [#allocation16], 4
      %s846 = int_to_ptr.vmem [resolvable:$true] %s845
      %848 = dma.vmem_to_hbm [thread:$0]  %s846, 128, %s11, [#allocation4]
    $region81: #{tpu_custom_call.1} parent=1 // pred_fallthru
      _
    // Predicated region
    $region82: #{tpu_custom_call.1} parent=1 // pred_check
      _
    $region83: #{tpu_custom_call.1} parent=1 // pred_check_branch
      %850 = sbr.rel (0) target = $region85
    $region84: #{tpu_custom_call.1} parent=1 // pred_region
      %s852 = ssub.s32 128, 128
      %853 = vsyncadd [#allocation18], %s852
      %s855 = sshll.u32 [#allocation17], 4
      %s856 = int_to_ptr.vmem [resolvable:$true] %s855
      %858 = dma.vmem_to_hbm [thread:$0]  %s856, 128, %s12, [#allocation18]
    $region85: #{tpu_custom_call.1} parent=1 // pred_fallthru
      _
    // Predicated region
    $region86: #{tpu_custom_call.1} parent=1 // pred_check
      _
    $region87: #{tpu_custom_call.1} parent=1 // pred_check_branch
      %860 = sbr.rel (0) target = $region89
    $region88: #{tpu_custom_call.1} parent=1 // pred_region
      %s862 = ssub.s32 128, 128
      %863 = vsyncadd [#allocation18], %s862
      %s865 = sshll.u32 [#allocation19], 4
      %s866 = int_to_ptr.vmem [resolvable:$true] %s865
      %868 = dma.vmem_to_hbm [thread:$0]  %s866, 128, %s13, [#allocation18]
    $region89: #{tpu_custom_call.1} parent=1 // pred_fallthru
      _
    // Predicated region
    $region90: #{tpu_custom_call.1} parent=1 // pred_check
      _
    $region91: #{tpu_custom_call.1} parent=1 // pred_check_branch
      %870 = sbr.rel (0) target = $region93
    $region92: #{tpu_custom_call.1} parent=1 // pred_region
      %871 = dma.done [#allocation4], 128
    $region93: #{tpu_custom_call.1} parent=1 // pred_fallthru
      _
    // Predicated region
    $region94: #{tpu_custom_call.1} parent=1 // pred_check
      _
    $region95: #{tpu_custom_call.1} parent=1 // pred_check_branch
      %873 = sbr.rel (0) target = $region97
    $region96: #{tpu_custom_call.1} parent=1 // pred_region
      %874 = dma.done [#allocation18], 128
    $region97: #{tpu_custom_call.1} parent=1 // pred_fallthru
      _
    // Predicated region
    $region98: #{tpu_custom_call.1} parent=1 // pred_check
      _
    $region99: #{tpu_custom_call.1} parent=1 // pred_check_branch
      %876 = sbr.rel (0) target = $region101
    $region100: #{tpu_custom_call.1} parent=1 // pred_region
      %877 = dma.done [#allocation18], 128
    $region101: #{tpu_custom_call.1} parent=1 // pred_fallthru
      _
    %878 = vsyncpa [#allocation3], 1
    %879 = vsyncpa [#allocation6], 1
    %880 = vsyncpa [#allocation9], 1
    %881 = vsyncpa [#allocation12], 1
    %882 = vsyncpa [#allocation15], 1
    %883 = vsyncpa [#allocation4], 1
    %884 = vsyncpa [#allocation18], 1

</llo_original>
